<compile_context>
chip_gen: v5e
topology: v5e:2x2
jax: 0.10.0
libtpu: 0.0.40
codegen_flags: <defaults>
</compile_context>

<pallas_src>
import jax
import jax.numpy as jnp
from jax.experimental import pallas as pl
from jax.experimental.pallas import tpu as pltpu


# ----------------------------- Pallas kernels ------------------------------

def _up_kernel(x_ref, w_ref, b_ref, o_ref):
    """ConvTranspose2d(k=2, s=2) as one matmul; interleave via output layout.

    x: (1, TH, W, Ch)          input row tile
    w: (Ch, 4*Cup)             columns ordered (di, dj, cout)
    b: (1, 4*Cup)
    o: (1, TH, 2, W, 2*Cup)    memory-identical to interleaved (2*TH, 2*W, Cup)
    """
    _, TH, W, Ch = x_ref.shape
    C2 = o_ref.shape[4]                        # 2 * Cup, (dj, cout) merged
    x2d = x_ref[0].reshape(TH * W, Ch)
    res = jnp.dot(x2d, w_ref[...], preferred_element_type=jnp.float32)
    res = res + b_ref[...]
    for di in range(2):                        # two lane-contiguous slabs
        o_ref[0, :, di, :, :] = res[:, di * C2:(di + 1) * C2].reshape(TH, W, C2)


def _transit_decode_kernel(y_ref, low_ref, w_t_ref, shift1_ref,
                           w_d_ref, shift2_ref, o_ref, pad_ref):
    """Fused transit (1x1 + BN + ReLU) + concat + conv3x3 + BN + ReLU.

    y:      (1, Ho, Wo, Cup)       upsampled high-level features
    low:    (1, Ho, Wo, Cl)        raw low-level features
    w_t:    (Cl, Cs)               1x1 weight with BN scale folded in
    shift1: (1, Cs)
    w_d:    (3, 3*(Cup+Cs), Cout)  3x3 weight, BN scale folded, kw folded in K
    shift2: (1, Cout)
    o:      (1, Ho, Wo, Cout)
    pad:    VMEM scratch (Ho+2, Wo, 3*(Cup+Cs)) im2col-over-kw, zero padded
    """
    _, Ho, Wo, Cup = y_ref.shape
    Cl = low_ref.shape[3]
    Cs = w_t_ref.shape[1]
    Ctot = Cup + Cs
    Cout = o_ref.shape[3]

    # ---- transit: conv1x1 + folded BN + ReLU (never leaves VMEM) ----
    low2d = low_ref[0].reshape(Ho * Wo, Cl)
    t = jnp.dot(low2d, w_t_ref[...], preferred_element_type=jnp.float32)
    t = jnp.maximum(t + shift1_ref[...], 0.0).reshape(Ho, Wo, Cs)

    # ---- build zero-padded concat([y, t]) as im2col-over-kw tile in VMEM ----
    pad_ref[...] = jnp.zeros_like(pad_ref)
    for kw in range(3):                        # statically unrolled
        c0 = kw * Ctot
        j0 = max(0, 1 - kw)                    # destination column range
        j1 = min(Wo, Wo + 1 - kw)
        s0 = j0 + kw - 1                       # source column range
        s1 = j1 + kw - 1
        pad_ref[1:Ho + 1, j0:j1, c0:c0 + Cup] = y_ref[0, :, s0:s1, :]
        pad_ref[1:Ho + 1, j0:j1, c0 + Cup:c0 + Ctot] = t[:, s0:s1, :]

    # ---- decode: 3 matmuls with K = 3*Ctot (kw folded), then shift + ReLU ----
    acc = jnp.zeros((Ho * Wo, Cout), jnp.float32)
    for kh in range(3):
        patch = pad_ref[kh:kh + Ho, :, :].reshape(Ho * Wo, 3 * Ctot)
        acc = acc + jnp.dot(patch, w_d_ref[kh],
                            preferred_element_type=jnp.float32)
    out = jnp.maximum(acc + shift2_ref[...], 0.0)
    o_ref[...] = out.reshape(1, Ho, Wo, Cout)


# ------------------------------- wrapper ------------------------------------

def _row_tile(h, cap=64):
    t = min(h, cap)
    while h % t:
        t -= 1
    return t


def decoder_block_forward(params, x_nchw, low_nchw, eps=1e-5):
    """Forward pass of _DecoderBlock (inference-mode BatchNorm)."""
    N, Ch, H, W = x_nchw.shape
    Nl, Cl, Hl, Wl = low_nchw.shape
    assert Nl == N and Hl == 2 * H and Wl == 2 * W, "low_feat must be 2x spatial"
    f32 = jnp.float32

    x = jnp.transpose(x_nchw, (0, 2, 3, 1)).astype(f32)       # NCHW -> NHWC
    low = jnp.transpose(low_nchw, (0, 2, 3, 1)).astype(f32)
    Ho, Wo = 2 * H, 2 * W

    # --- self.up : ConvTranspose2d(Ch, Cup, k=2, s=2) -------------------------
    w_up = params["w_up"].astype(f32)                         # (Ch, Cup, 2, 2)
    Cup = w_up.shape[1]
    w_up_pack = jnp.transpose(w_up, (0, 2, 3, 1)).reshape(Ch, 4 * Cup)
    b_up_pack = jnp.tile(params["b_up"].astype(f32), 4)[None, :]

    TH = _row_tile(H)
    up_cost = pl.CostEstimate(
        flops=2 * N * H * W * Ch * 4 * Cup,
        transcendentals=0,
        bytes_accessed=4 * (x.size + N * Ho * Wo * Cup
                            + w_up_pack.size + b_up_pack.size))
    up_out = pl.pallas_call(
        _up_kernel,
        out_shape=jax.ShapeDtypeStruct((N, H, 2, W, 2 * Cup), f32),
        grid=(N, H // TH),
        in_specs=[
            pl.BlockSpec((1, TH, W, Ch), lambda n, t: (n, t, 0, 0)),
            pl.BlockSpec((Ch, 4 * Cup), lambda n, t: (0, 0)),
            pl.BlockSpec((1, 4 * Cup), lambda n, t: (0, 0)),
        ],
        out_specs=pl.BlockSpec((1, TH, 2, W, 2 * Cup),
                               lambda n, t: (n, t, 0, 0, 0)),
        compiler_params=pltpu.CompilerParams(
            dimension_semantics=("parallel", "parallel"),
            vmem_limit_bytes=32 * 1024 * 1024),
        cost_estimate=up_cost,
    )(x, w_up_pack, b_up_pack)
    # Free metadata reshape: (N, H, 2, W, 2*Cup) is already interleaved NHWC.
    y = up_out.reshape(N, Ho, Wo, Cup)

    # --- self.transit + self.decode, fused (BN folded into weights) -----------
    scale1 = params["gamma1"] / jnp.sqrt(params["var1"] + eps)
    shift1 = (params["beta1"] - params["mean1"] * scale1)[None, :].astype(f32)
    w_t_fold = (params["w_transit"][:, :, 0, 0].T * scale1[None, :]).astype(f32)
    Cs = w_t_fold.shape[1]
    Ctot = Cup + Cs

    scale2 = params["gamma2"] / jnp.sqrt(params["var2"] + eps)
    shift2 = (params["beta2"] - params["mean2"] * scale2)[None, :].astype(f32)
    Cout = params["w_decode"].shape[0]
    w_d = jnp.transpose(params["w_decode"], (2, 3, 1, 0)) \
        * scale2[None, None, None, :]
    w_d_wide = w_d.reshape(3, 3 * Ctot, Cout).astype(f32)     # kw folded into K

    dec_cost = pl.CostEstimate(
        flops=2 * N * Ho * Wo * (Cl * Cs + 9 * Ctot * Cout),
        transcendentals=0,
        bytes_accessed=4 * (N * Ho * Wo * (Cup + Cl + Cout)
                            + w_t_fold.size + w_d_wide.size))
    out = pl.pallas_call(
        _transit_decode_kernel,
        out_shape=jax.ShapeDtypeStruct((N, Ho, Wo, Cout), f32),
        grid=(N,),
        in_specs=[
            pl.BlockSpec((1, Ho, Wo, Cup), lambda n: (n, 0, 0, 0)),
            pl.BlockSpec((1, Ho, Wo, Cl), lambda n: (n, 0, 0, 0)),
            pl.BlockSpec((Cl, Cs), lambda n: (0, 0)),
            pl.BlockSpec((1, Cs), lambda n: (0, 0)),
            pl.BlockSpec((3, 3 * Ctot, Cout), lambda n: (0, 0, 0)),
            pl.BlockSpec((1, Cout), lambda n: (0, 0)),
        ],
        out_specs=pl.BlockSpec((1, Ho, Wo, Cout), lambda n: (n, 0, 0, 0)),
        scratch_shapes=[pltpu.VMEM((Ho + 2, Wo, 3 * Ctot), f32)],
        compiler_params=pltpu.CompilerParams(
            dimension_semantics=("parallel",),
            vmem_limit_bytes=32 * 1024 * 1024),
        cost_estimate=dec_cost,
    )(y, low, w_t_fold, shift1, w_d_wide, shift2)

    return jnp.transpose(out, (0, 3, 1, 2))                   # NHWC -> NCHW


# --------------------------- pure-JAX reference ------------------------------

def ref_forward(params, x, low, eps=1e-5):
    w_up, b_up = params["w_up"], params["b_up"]
    N, C, H, W = x.shape
    Co = w_up.shape[1]
    y = jnp.zeros((N, Co, 2 * H, 2 * W), jnp.float32)
    for di in range(2):
        for dj in range(2):
            contrib = (jnp.einsum("nchw,co->nohw", x, w_up[:, :, di, dj])
                       + b_up[None, :, None, None])
            y = y.at[:, :, di::2, dj::2].set(contrib)

    t = jnp.einsum("nchw,oc->nohw", low, params["w_transit"][:, :, 0, 0])
    t = ((t - params["mean1"][None, :, None, None])
         / jnp.sqrt(params["var1"] + eps)[None, :, None, None]
         * params["gamma1"][None, :, None, None]
         + params["beta1"][None, :, None, None])
    t = jnp.maximum(t, 0.0)

    cat = jnp.concatenate([y, t], axis=1)
    d = jax.lax.conv_general_dilated(
        cat, params["w_decode"], (1, 1), ((1, 1), (1, 1)),
        dimension_numbers=("NCHW", "OIHW", "NCHW"))
    d = ((d - params["mean2"][None, :, None, None])
         / jnp.sqrt(params["var2"] + eps)[None, :, None, None]
         * params["gamma2"][None, :, None, None]
         + params["beta2"][None, :, None, None])
    return jnp.maximum(d, 0.0)


# ---------------------------------- main -------------------------------------

if __name__ == "__main__":
    N, C_high, C_low, C_out = 2, 8, 8, 8
    scale_ratio = 1
    H = W = 8
    C_low_s = C_low // scale_ratio
    C_in = C_high + C_low_s

    keys = jax.random.split(jax.random.PRNGKey(0), 16)
    x = jax.random.normal(keys[0], (N, C_high, H, W), jnp.float32)
    low_feat = jax.random.normal(keys[1], (N, C_low, 2 * H, 2 * W), jnp.float32)

    params = dict(
        w_up=jax.random.normal(keys[2], (C_high, C_high, 2, 2), jnp.float32) * 0.2,
        b_up=jax.random.normal(keys[3], (C_high,), jnp.float32) * 0.1,
        w_transit=jax.random.normal(keys[4], (C_low_s, C_low, 1, 1), jnp.float32) * 0.2,
        gamma1=jax.random.uniform(keys[5], (C_low_s,), jnp.float32, 0.5, 1.5),
        beta1=jax.random.normal(keys[6], (C_low_s,), jnp.float32) * 0.1,
        mean1=jax.random.normal(keys[7], (C_low_s,), jnp.float32) * 0.1,
        var1=jax.random.uniform(keys[8], (C_low_s,), jnp.float32, 0.5, 1.5),
        w_decode=jax.random.normal(keys[9], (C_out, C_in, 3, 3), jnp.float32) * 0.1,
        gamma2=jax.random.uniform(keys[10], (C_out,), jnp.float32, 0.5, 1.5),
        beta2=jax.random.normal(keys[11], (C_out,), jnp.float32) * 0.1,
        mean2=jax.random.normal(keys[12], (C_out,), jnp.float32) * 0.1,
        var2=jax.random.uniform(keys[13], (C_out,), jnp.float32, 0.5, 1.5),
    )

    out = decoder_block_forward(params, x, low_feat)
    out = jax.block_until_ready(out)

    ref = ref_forward(params, x, low_feat)
    assert out.shape == (N, C_out, 2 * H, 2 * W), out.shape
    max_err = float(jnp.max(jnp.abs(out - ref)))
    assert jnp.allclose(out, ref, rtol=1e-4, atol=1e-4), f"max_err={max_err}"

    print("KERNEL_OK")
</pallas_src>

<mosaic_0001>
module attributes {stable_mosaic.version = 11 : i64} {
  func.func @_up_kernel(%arg0: i32, %arg1: i32, %arg2: memref<1x8x8x8xf32, #tpu.memory_space<vmem>>, %arg3: memref<8x32xf32, #tpu.memory_space<vmem>>, %arg4: memref<1x32xf32, #tpu.memory_space<vmem>>, %arg5: memref<1x8x2x8x16xf32, #tpu.memory_space<vmem>>) attributes {dimension_semantics = [#tpu.dimension_semantics<parallel>, #tpu.dimension_semantics<parallel>], iteration_bounds = array<i64: 2, 1>, scalar_prefetch = 0 : i64, scratch_operands = 0 : i64, tpu.core_type = #tpu.core_type<tc>, window_params = [{transform_indices = @transform_0, window_bounds = array<i64: 1, 8, 8, 8>}, {pipeline_mode = #tpu.pipeline_mode<synchronous>, transform_indices = @transform_1, window_bounds = array<i64: 8, 32>}, {pipeline_mode = #tpu.pipeline_mode<synchronous>, transform_indices = @transform_2, window_bounds = array<i64: 1, 32>}, {transform_indices = @transform_3, window_bounds = array<i64: 1, 8, 2, 8, 16>}]} {
    %c0 = arith.constant 0 : index
    %c0_0 = arith.constant 0 : index
    %c0_1 = arith.constant 0 : index
    %c0_2 = arith.constant 0 : index
    %0 = vector.load %arg2[%c0, %c0_0, %c0_1, %c0_2] : memref<1x8x8x8xf32, #tpu.memory_space<vmem>>, vector<1x8x8x8xf32>
    %1 = vector.shape_cast %0 : vector<1x8x8x8xf32> to vector<8x8x8xf32>
    %2 = vector.shape_cast %1 : vector<8x8x8xf32> to vector<64x8xf32>
    %c0_3 = arith.constant 0 : index
    %c0_4 = arith.constant 0 : index
    %3 = vector.load %arg3[%c0_3, %c0_4] : memref<8x32xf32, #tpu.memory_space<vmem>>, vector<8x32xf32>
    %cst = arith.constant dense<0.000000e+00> : vector<64x32xf32>
    %4 = tpu.matmul %2, %3, %cst {dimension_numbers = #tpu.dot_dimension_numbers<[1], [0], [0], [1], [0, 0, 1, 1], [], []>} : vector<64x8xf32>, vector<8x32xf32>, vector<64x32xf32> -> vector<64x32xf32>
    %c0_5 = arith.constant 0 : index
    %c0_6 = arith.constant 0 : index
    %5 = vector.load %arg4[%c0_5, %c0_6] : memref<1x32xf32, #tpu.memory_space<vmem>>, vector<1x32xf32>
    %6 = vector.broadcast %5 : vector<1x32xf32> to vector<64x32xf32>
    %7 = arith.addf %4, %6 : vector<64x32xf32>
    %8 = vector.extract_strided_slice %7 {offsets = [0, 0], sizes = [64, 16], strides = [1, 1]} : vector<64x32xf32> to vector<64x16xf32>
    %9 = vector.shape_cast %8 : vector<64x16xf32> to vector<8x8x16xf32>
    %c0_7 = arith.constant 0 : index
    %c0_8 = arith.constant 0 : index
    %c0_9 = arith.constant 0 : index
    %c0_10 = arith.constant 0 : index
    %c0_11 = arith.constant 0 : index
    %10 = vector.load %arg5[%c0_7, %c0_8, %c0_9, %c0_10, %c0_11] : memref<1x8x2x8x16xf32, #tpu.memory_space<vmem>>, vector<1x8x1x8x16xf32>
    %11 = vector.shape_cast %10 : vector<1x8x1x8x16xf32> to vector<8x8x16xf32>
    %12 = vector.shape_cast %9 : vector<8x8x16xf32> to vector<1x8x1x8x16xf32>
    tpu.vector_store %arg5[%c0_7, %c0_8, %c0_9, %c0_10, %c0_11], %12 {strides = array<i32>} : memref<1x8x2x8x16xf32, #tpu.memory_space<vmem>>, vector<1x8x1x8x16xf32>,
    %13 = vector.extract_strided_slice %7 {offsets = [0, 16], sizes = [64, 16], strides = [1, 1]} : vector<64x32xf32> to vector<64x16xf32>
    %14 = vector.shape_cast %13 : vector<64x16xf32> to vector<8x8x16xf32>
    %c0_12 = arith.constant 0 : index
    %c0_13 = arith.constant 0 : index
    %c1 = arith.constant 1 : index
    %c0_14 = arith.constant 0 : index
    %c0_15 = arith.constant 0 : index
    %15 = vector.load %arg5[%c0_12, %c0_13, %c1, %c0_14, %c0_15] : memref<1x8x2x8x16xf32, #tpu.memory_space<vmem>>, vector<1x8x1x8x16xf32>
    %16 = vector.shape_cast %15 : vector<1x8x1x8x16xf32> to vector<8x8x16xf32>
    %17 = vector.shape_cast %14 : vector<8x8x16xf32> to vector<1x8x1x8x16xf32>
    tpu.vector_store %arg5[%c0_12, %c0_13, %c1, %c0_14, %c0_15], %17 {strides = array<i32>} : memref<1x8x2x8x16xf32, #tpu.memory_space<vmem>>, vector<1x8x1x8x16xf32>,
    return
  }
  func.func @transform_0(%arg0: i32, %arg1: i32) -> (i32, i32, i32, i32) {
    %c0_i32 = arith.constant 0 : i32
    %c0_i32_0 = arith.constant 0 : i32
    %c0_i32_1 = arith.constant 0 : i32
    return %arg0, %arg1, %c0_i32, %c0_i32_0 : i32, i32, i32, i32
  }
  func.func @transform_1(%arg0: i32, %arg1: i32) -> (i32, i32) {
    %c0_i32 = arith.constant 0 : i32
    %c0_i32_0 = arith.constant 0 : i32
    %c0_i32_1 = arith.constant 0 : i32
    return %c0_i32, %c0_i32_0 : i32, i32
  }
  func.func @transform_2(%arg0: i32, %arg1: i32) -> (i32, i32) {
    %c0_i32 = arith.constant 0 : i32
    %c0_i32_0 = arith.constant 0 : i32
    %c0_i32_1 = arith.constant 0 : i32
    return %c0_i32, %c0_i32_0 : i32, i32
  }
  func.func @transform_3(%arg0: i32, %arg1: i32) -> (i32, i32, i32, i32, i32) {
    %c0_i32 = arith.constant 0 : i32
    %c0_i32_0 = arith.constant 0 : i32
    %c0_i32_1 = arith.constant 0 : i32
    %c0_i32_2 = arith.constant 0 : i32
    return %arg0, %arg1, %c0_i32, %c0_i32_0, %c0_i32_1 : i32, i32, i32, i32, i32
  }
}

</mosaic_0001>

<llo_original>
// kernel: tpu_custom_call.1
$region0: #{tpu_custom_call.1}
  #allocation0 [shape = 'u32[]', space=smem, size = 0x4, offset = 0x4, fixed_abs, tag = 'smem constant byte address 0x4 - core index']
  #allocation1 [shape = 'u32[72,128]{1,0:T(1,128)}', space=vmem, size = 0x9000, scoped, tag = 'internal scratch']
  %s0 = inlined_call_operand.hbm [shape: f32[2,8,8,8], index: 0, kind: input, shape index: {}]
  %s1 = inlined_call_operand.hbm [shape: f32[8,32], index: 1, kind: input, shape index: {}]
  %s2 = inlined_call_operand.vmem [shape: f32[1,32], index: 2, kind: input, shape index: {}]
  %s3 = inlined_call_operand.hbm [shape: f32[2,8,2,8,16], index: 3, kind: output, shape index: {}]
  %s4 = sld [smem:[#allocation0]]
  $region53: #{tpu_custom_call.1} parent=0
    _
  %s6 = ssub.s32 1, %s4
  %s7 = scalar_select 0, %s6, %s4
  $region1: #{tpu_custom_call.1} parent=0
    #allocation2 [shape = 'u8[65536]{0}', space=vmem, size = 0x10000, scoped, tag = 'input window, operand 0']
    #allocation3 [shape = 's32[2]{0}', space=sflag, size = 0x8, scoped, tag = 'scoped memory for tpu_custom_call.1']
    #allocation4 [shape = 's32[2]{0}', space=sflag, size = 0x8, scoped, tag = 'scoped memory for tpu_custom_call.1']
    #allocation5 [shape = 'u8[4096]{0}', space=vmem, size = 0x1000, scoped, tag = 'input window, operand 1, single buffered']
    #allocation6 [shape = 's32[1]{0}', space=sflag, size = 0x4, scoped, tag = 'scoped memory for tpu_custom_call.1']
    #allocation7 [shape = 'u8[131072]{0}', space=vmem, size = 0x20000, scoped, tag = 'output window, operand 0']
    %8 = vsyncpa [#allocation3], 0
    %s9 = scalar_lea.sflag [#allocation3], 1
    %10 = vsyncpa %s9, 0
    %11 = vsyncpa [#allocation6], 0
    %12 = vsyncpa [#allocation4], 0
    %s13 = scalar_lea.sflag [#allocation4], 1
    %14 = vsyncpa %s13, 0
    loop: start=0, step=1, limit=4
    $region2: #{tpu_custom_call.1} parent=1 // loop_pre_header
      _
    $region3: #{tpu_custom_call.1} parent=1 // loop_header
      %s16 = sphi 0, %s20
      %p17 = scmp.ge.s32.totalorder %s16, 4
      %s23 = sphi 0, %s35
      %s24 = sphi 0, %s31
      %s25 = sphi 0, %s23
      %s26 = sphi 0, %s24
      %s27 = sphi 0, %s25
      %s28 = sphi 0, %s26
      %s40 = sphi 0, %s42
      %s43 = sphi 0, %s40
      %s44 = sphi 0, %s43
      %s60 = sphi 0, %s44
      %s64 = sphi 0, %s64
      %s66 = sphi 0, %s64
      %s67 = sphi 0, %s66
      %s81 = sphi 0, %s67
      %s85 = sphi 0, %s85
      %s87 = sphi 0, %s85
      %s88 = sphi 0, %s87
      %s102 = sphi 0, %s88
      %s110 = sphi 0, %s112
      %s113 = sphi 0, %s110
      %s114 = sphi 0, %s113
      %s130 = sphi 0, %s114
    $region4: #{tpu_custom_call.1} parent=1 // loop_header_branch
      %19 = sbr.rel (%p17) target = $region8
    $region5: #{tpu_custom_call.1} parent=1 // loop_body
      %s21 = ssub.s32 %s16, 1
      %s22 = ssub.s32 %s16, 2
      %s29 = sadd.s32 1, %s24
      %p30 = scmp.ge.s32.totalorder %s29, 1
      %s31 = scalar_select %p30, 0, %s29
      %s32 = sadd.s32 1, %s23
      %s33 = scalar_select %p30, %s32, %s23
      %p34 = scmp.ge.s32.totalorder %s33, 2
      %s35 = scalar_select %p34, 0, %s33
      %s36 = ssub.s32 %s23, %s35
      %s37 = ssub.s32 %s24, %s31
      %s38 = sor.u32 %s36, %s37
      %p39 = scmp.eq.s32.totalorder %s38, 0
      %s41 = sadd.s32 %s40, 1
      %s42 = scalar_select %p39, %s40, %s41
      %p45 = pneg %p39
      %p46 = scmp.eq.s32.totalorder %s16, 1
      %p47 = por %p45, %p46
      %p48 = scmp.ne.s32.totalorder %s40, %s43
      %p49 = scmp.eq.s32.totalorder %s16, 0
      %p50 = por %p48, %p49
      %p51 = scmp.ne.s32.totalorder %s40, %s43
      %p52 = scmp.eq.s32.totalorder %s21, 1
      %p53 = por %p51, %p52
      %p54 = scmp.ne.s32.totalorder %s43, %s44
      %p55 = scmp.eq.s32.totalorder %s21, 0
      %p56 = por %p54, %p55
      %p57 = scmp.ne.s32.totalorder %s43, %s44
      %p58 = scmp.eq.s32.totalorder %s22, 1
      %p59 = por %p57, %p58
      %p61 = scmp.ne.s32.totalorder %s44, %s60
      %p62 = scmp.eq.s32.totalorder %s22, 0
      %p63 = por %p61, %p62
      %s65 = sadd.s32 %s64, 1
      %p68 = scmp.eq.s32.totalorder %s16, 1
      %p69 = scmp.ne.s32.totalorder %s64, %s66
      %p70 = scmp.eq.s32.totalorder %s16, 0
      %p71 = por %p69, %p70
      %p72 = scmp.ne.s32.totalorder %s64, %s66
      %p73 = scmp.eq.s32.totalorder %s21, 1
      %p74 = por %p72, %p73
      %p75 = scmp.ne.s32.totalorder %s66, %s67
      %p76 = scmp.eq.s32.totalorder %s21, 0
      %p77 = por %p75, %p76
      %p78 = scmp.ne.s32.totalorder %s66, %s67
      %p79 = scmp.eq.s32.totalorder %s22, 1
      %p80 = por %p78, %p79
      %p82 = scmp.ne.s32.totalorder %s67, %s81
      %p83 = scmp.eq.s32.totalorder %s22, 0
      %p84 = por %p82, %p83
      %s86 = sadd.s32 %s85, 1
      %p89 = scmp.eq.s32.totalorder %s16, 1
      %p90 = scmp.ne.s32.totalorder %s85, %s87
      %p91 = scmp.eq.s32.totalorder %s16, 0
      %p92 = por %p90, %p91
      %p93 = scmp.ne.s32.totalorder %s85, %s87
      %p94 = scmp.eq.s32.totalorder %s21, 1
      %p95 = por %p93, %p94
      %p96 = scmp.ne.s32.totalorder %s87, %s88
      %p97 = scmp.eq.s32.totalorder %s21, 0
      %p98 = por %p96, %p97
      %p99 = scmp.ne.s32.totalorder %s87, %s88
      %p100 = scmp.eq.s32.totalorder %s22, 1
      %p101 = por %p99, %p100
      %p103 = scmp.ne.s32.totalorder %s88, %s102
      %p104 = scmp.eq.s32.totalorder %s22, 0
      %p105 = por %p103, %p104
      %s106 = ssub.s32 %s23, %s35
      %s107 = ssub.s32 %s24, %s31
      %s108 = sor.u32 %s106, %s107
      %p109 = scmp.eq.s32.totalorder %s108, 0
      %s111 = sadd.s32 %s110, 1
      %s112 = scalar_select %p109, %s110, %s111
      %p115 = pneg %p109
      %p116 = scmp.eq.s32.totalorder %s16, 1
      %p117 = por %p115, %p116
      %p118 = scmp.ne.s32.totalorder %s110, %s113
      %p119 = scmp.eq.s32.totalorder %s16, 0
      %p120 = por %p118, %p119
      %p121 = scmp.ne.s32.totalorder %s110, %s113
      %p122 = scmp.eq.s32.totalorder %s21, 1
      %p123 = por %p121, %p122
      %p124 = scmp.ne.s32.totalorder %s113, %s114
      %p125 = scmp.eq.s32.totalorder %s21, 0
      %p126 = por %p124, %p125
      %p127 = scmp.ne.s32.totalorder %s113, %s114
      %p128 = scmp.eq.s32.totalorder %s22, 1
      %p129 = por %p127, %p128
      %p131 = scmp.ne.s32.totalorder %s114, %s130
      %p132 = scmp.eq.s32.totalorder %s22, 0
      %p133 = por %p131, %p132
      %p134 = scmp.le.s32.totalorder 1, %s16
      %p135 = scmp.lt.s32.totalorder %s16, 3
      %p136 = pnand %p134, %p135
      %p137 = pneg %p136
      // Predicated region
      $region9: #{tpu_custom_call.1} parent=5 // pred_check
        _
      $region10: #{tpu_custom_call.1} parent=5 // pred_check_branch
        %139 = sbr.rel (%p136) target = $region12
      $region11: #{tpu_custom_call.1} parent=5 // pred_region
        %s140 = ssub.s32 %s16, 1
        // Predicated region
        $region13: #{tpu_custom_call.1} parent=11 // pred_check
          %p141 = pneg %p77
        $region14: #{tpu_custom_call.1} parent=11 // pred_check_branch
          %143 = sbr.rel (%p141) target = $region16
        $region15: #{tpu_custom_call.1} parent=11 // pred_region
          %145 = vsyncadd [#allocation6], 0
          %s147 = sshll.u32 %s1, 4
          %s148 = int_to_ptr.hbm [resolvable:$true] %s147
          %s149 = sshll.u32 [#allocation5], 4
          %s150 = int_to_ptr.vmem [resolvable:$true] %s149
          %152 = dma.hbm_to_vmem [thread:$0]  %s148, 128, %s150, [#allocation6]
        $region16: #{tpu_custom_call.1} parent=11 // pred_fallthru
          _
        // Predicated region
        $region17: #{tpu_custom_call.1} parent=11 // pred_check
          %p153 = pneg %p98
        $region18: #{tpu_custom_call.1} parent=11 // pred_check_branch
          %155 = sbr.rel (%p153) target = $region20
        $region19: #{tpu_custom_call.1} parent=11 // pred_region
          _
        $region20: #{tpu_custom_call.1} parent=11 // pred_fallthru
          _
      $region12: #{tpu_custom_call.1} parent=5 // pred_fallthru
        _
      %p156 = scmp.lt.s32.totalorder %s16, 2
      // Predicated region
      $region21: #{tpu_custom_call.1} parent=5 // pred_check
        %p157 = pneg %p156
      $region22: #{tpu_custom_call.1} parent=5 // pred_check_branch
        %159 = sbr.rel (%p157) target = $region24
      $region23: #{tpu_custom_call.1} parent=5 // pred_region
        // Predicated region
        $region25: #{tpu_custom_call.1} parent=23 // pred_check
          %p160 = pneg %p50
        $region26: #{tpu_custom_call.1} parent=23 // pred_check_branch
          %162 = sbr.rel (%p160) target = $region28
        $region27: #{tpu_custom_call.1} parent=23 // pred_region
          %s163 = sand.u32 %s40, 1
          %s164 = scalar_lea.sflag [#allocation3], %s163
          %s165 = sand.u32 %s40, 1
          %s166 = smul.addr %s165, 64
          %s167 = scalar_lea.vmem [#allocation2], %s166
          %s168 = smul.u32 8, %s24
          %170 = vsyncadd %s164, 0
          %s171 = smul.addr %s23, 8
          %s172 = sadd.s32 %s168, %s171
          %s173 = smul.addr %s172, 8
          %s174 = scalar_lea.hbm %s0, %s173
          %s175 = sshll.u32 %s174, 4
          %s176 = int_to_ptr.hbm [resolvable:$true] %s175
          %s177 = sshll.u32 %s167, 4
          %s178 = int_to_ptr.vmem [resolvable:$true] %s177
          %183 = dma.hbm_to_vmem [thread:$0]  %s176, 1024, %s178, %s164, 128, 128, 8
        $region28: #{tpu_custom_call.1} parent=23 // pred_fallthru
          _
      $region24: #{tpu_custom_call.1} parent=5 // pred_fallthru
        _
      %p184 = scmp.le.s32.totalorder 1, %s16
      %p185 = scmp.lt.s32.totalorder %s16, 3
      %p186 = pnand %p184, %p185
      %p187 = pneg %p186
      // Predicated region
      $region29: #{tpu_custom_call.1} parent=5 // pred_check
        _
      $region30: #{tpu_custom_call.1} parent=5 // pred_check_branch
        %189 = sbr.rel (%p186) target = $region32
      $region31: #{tpu_custom_call.1} parent=5 // pred_region
        %s190 = ssub.s32 %s16, 1
        %s191 = sand.u32 %s43, 1
        %s192 = scalar_lea.sflag [#allocation3], %s191
        %s193 = sand.u32 %s43, 1
        %s194 = smul.addr %s193, 64
        %s195 = scalar_lea.vmem [#allocation2], %s194
        // Predicated region
        $region33: #{tpu_custom_call.1} parent=31 // pred_check
          %p196 = pneg %p56
        $region34: #{tpu_custom_call.1} parent=31 // pred_check_branch
          %198 = sbr.rel (%p196) target = $region36
        $region35: #{tpu_custom_call.1} parent=31 // pred_region
          %200 = dma.done %s192, 1024
        $region36: #{tpu_custom_call.1} parent=31 // pred_fallthru
          _
        // Predicated region
        $region37: #{tpu_custom_call.1} parent=31 // pred_check
          %p201 = pneg %p77
        $region38: #{tpu_custom_call.1} parent=31 // pred_check_branch
          %203 = sbr.rel (%p201) target = $region40
        $region39: #{tpu_custom_call.1} parent=31 // pred_region
          %205 = dma.done [#allocation6], 128
        $region40: #{tpu_custom_call.1} parent=31 // pred_fallthru
          _
        %s206 = sand.u32 %s43, 1
        %s207 = scalar_lea.sflag [#allocation3], %s206
        %s208 = sand.u32 %s43, 1
        %s209 = smul.addr %s208, 64
        %s210 = scalar_lea.vmem [#allocation2], %s209
        %p211 = pneg %p56
        %p212 = pneg %p53
        %p213 = pneg %p77
        %p214 = pneg %p74
        %p215 = pneg %p98
        %p216 = pneg %p95
        %p217 = pneg %p126
        %p218 = pneg %p123
        %s219 = sand.u32 %s113, 1
        %s220 = scalar_lea.sflag [#allocation4], %s219
        %s221 = sand.u32 %s113, 1
        %s222 = smul.addr %s221, 128
        %s223 = scalar_lea.vmem [#allocation7], %s222
        %s224 = smul.u32 8, %s26
        %s225 = smul.u32 8, %s26
        %v226 = vld [vmem:[%s195] sm:$0xff]
        %v227 = vld [vmem:[%s195 + $0x8] sm:$0xff]
        %v228 = vld [vmem:[%s195 + $0x10] sm:$0xff]
        %v229 = vld [vmem:[%s195 + $0x18] sm:$0xff]
        %v230 = vld [vmem:[%s195 + $0x20] sm:$0xff]
        %v231 = vld [vmem:[%s195 + $0x28] sm:$0xff]
        %v232 = vld [vmem:[%s195 + $0x30] sm:$0xff]
        %v233 = vld [vmem:[%s195 + $0x38] sm:$0xff]
        %v234 = vld [vmem:[#allocation5] sm:$0xff]
        %v235 = vld [vmem:[%s2] sm:$0x1]
        %v237 = vperm.slane %v235, 0
        %vm239 = vcmask 64512
        %v241 = vsel %vm239, %v226, 0
        %v244 = vsel %vm239, %v227, 0
        %v247 = vsel %vm239, %v228, 0
        %v250 = vsel %vm239, %v229, 0
        %v253 = vsel %vm239, %v230, 0
        %v256 = vsel %vm239, %v231, 0
        %v259 = vsel %vm239, %v232, 0
        %v262 = vsel %vm239, %v233, 0
        %264 = vmatpush.msra.mxu0 0.0
        %265 = vmatpush.msra.mxu0 0.0
        %266 = vmatpush.msra.mxu0 0.0
        %267 = vmatpush.msra.mxu0 0.0
        %268 = vmatpush.msra.mxu0 0.0
        %269 = vmatpush.msra.mxu0 0.0
        %270 = vmatpush.msra.mxu0 0.0
        %271 = vmatpush.msra.mxu0 0.0
        %272 = vmatpush.msra.mxu0 0.0
        %273 = vmatpush.msra.mxu0 0.0
        %274 = vmatpush.msra.mxu0 0.0
        %275 = vmatpush.msra.mxu0 0.0
        %276 = vmatpush.msra.mxu0 0.0
        %277 = vmatpush.msra.mxu0 0.0
        %278 = vmatpush.msra.mxu0 0.0
        %279 = vmatpush.msra.mxu0 %v234
        %280 = vmatmul.f32.gmra.mxu0 %v241
        %v281 = vpop.f32.mrf.mxu0
        %v282 = vadd.f32 %v237, %v281
        %283 = vmatmul.f32.gmra.mxu0 %v244
        %v284 = vpop.f32.mrf.mxu0
        %v285 = vadd.f32 %v237, %v284
        %286 = vmatmul.f32.gmra.mxu0 %v247
        %v287 = vpop.f32.mrf.mxu0
        %v288 = vadd.f32 %v237, %v287
        %289 = vmatmul.f32.gmra.mxu0 %v250
        %v290 = vpop.f32.mrf.mxu0
        %v291 = vadd.f32 %v237, %v290
        %292 = vmatmul.f32.gmra.mxu0 %v253
        %v293 = vpop.f32.mrf.mxu0
        %v294 = vadd.f32 %v237, %v293
        %295 = vmatmul.f32.gmra.mxu0 %v256
        %v296 = vpop.f32.mrf.mxu0
        %v297 = vadd.f32 %v237, %v296
        %298 = vmatmul.f32.gmra.mxu0 %v259
        %v299 = vpop.f32.mrf.mxu0
        %v300 = vadd.f32 %v237, %v299
        %301 = vmatmul.f32.gmra.mxu0 %v262
        %v302 = vpop.f32.mrf.mxu0
        %v303 = vadd.f32 %v237, %v302
        %304 = vdwg.mxu0
        %vm305 = vcmask 130048
        %306 = vst.msk [vmem:[%s223] sm:$0xff] %vm305, %v282
        %307 = vst.msk [vmem:[%s223 + $0x10] sm:$0xff] %vm305, %v285
        %308 = vst.msk [vmem:[%s223 + $0x20] sm:$0xff] %vm305, %v288
        %309 = vst.msk [vmem:[%s223 + $0x30] sm:$0xff] %vm305, %v291
        %310 = vst.msk [vmem:[%s223 + $0x40] sm:$0xff] %vm305, %v294
        %311 = vst.msk [vmem:[%s223 + $0x50] sm:$0xff] %vm305, %v297
        %312 = vst.msk [vmem:[%s223 + $0x60] sm:$0xff] %vm305, %v300
        %313 = vst.msk [vmem:[%s223 + $0x70] sm:$0xff] %vm305, %v303
        %322 = vrot.lane.b32.xlu0 %v282, 112
        %v323 = vpop.permute.xlu0 %322
        %324 = vrot.lane.b32.xlu0 %v285, 112
        %v325 = vpop.permute.xlu0 %324
        %326 = vrot.lane.b32.xlu0 %v288, 112
        %v327 = vpop.permute.xlu0 %326
        %328 = vrot.lane.b32.xlu0 %v291, 112
        %v329 = vpop.permute.xlu0 %328
        %330 = vrot.lane.b32.xlu0 %v294, 112
        %v331 = vpop.permute.xlu0 %330
        %332 = vrot.lane.b32.xlu0 %v297, 112
        %v333 = vpop.permute.xlu0 %332
        %334 = vrot.lane.b32.xlu0 %v300, 112
        %v335 = vpop.permute.xlu0 %334
        %336 = vrot.lane.b32.xlu0 %v303, 112
        %v337 = vpop.permute.xlu0 %336
        %s346 = scalar_lea.vmem %s223, 8 [#allocation7]
        %347 = vst.msk [vmem:[%s346] sm:$0xff] %vm305, %v323
        %348 = vst.msk [vmem:[%s346 + $0x10] sm:$0xff] %vm305, %v325
        %349 = vst.msk [vmem:[%s346 + $0x20] sm:$0xff] %vm305, %v327
        %350 = vst.msk [vmem:[%s346 + $0x30] sm:$0xff] %vm305, %v329
        %351 = vst.msk [vmem:[%s346 + $0x40] sm:$0xff] %vm305, %v331
        %352 = vst.msk [vmem:[%s346 + $0x50] sm:$0xff] %vm305, %v333
        %353 = vst.msk [vmem:[%s346 + $0x60] sm:$0xff] %vm305, %v335
        %354 = vst.msk [vmem:[%s346 + $0x70] sm:$0xff] %vm305, %v337
        %s355 = sand.u32 %s113, 1
        %s356 = scalar_lea.sflag [#allocation4], %s355
        %s357 = sand.u32 %s113, 1
        %s358 = smul.addr %s357, 128
        %s359 = scalar_lea.vmem [#allocation7], %s358
        // Predicated region
        $region41: #{tpu_custom_call.1} parent=31 // pred_check
          %p360 = pneg %p123
        $region42: #{tpu_custom_call.1} parent=31 // pred_check_branch
          %362 = sbr.rel (%p360) target = $region44
        $region43: #{tpu_custom_call.1} parent=31 // pred_region
          %s363 = smul.u32 8, %s26
          %365 = vsyncadd %s356, 0
          %s366 = smul.addr %s363, 2
          %s367 = smul.addr %s25, 16
          %s368 = sadd.s32 %s366, %s367
          %s369 = smul.addr %s368, 8
          %s370 = scalar_lea.hbm %s3, %s369
          %s371 = sshll.u32 %s359, 4
          %s372 = int_to_ptr.vmem [resolvable:$true] %s371
          %s373 = sshll.u32 %s370, 4
          %s374 = int_to_ptr.hbm [resolvable:$true] %s373
          %379 = dma.vmem_to_hbm [thread:$0]  %s372, 2048, %s374, %s356, 128, 128, 8
        $region44: #{tpu_custom_call.1} parent=31 // pred_fallthru
          _
      $region32: #{tpu_custom_call.1} parent=5 // pred_fallthru
        _
      %p380 = scmp.le.s32.totalorder 2, %s16
      // Predicated region
      $region45: #{tpu_custom_call.1} parent=5 // pred_check
        %p381 = pneg %p380
      $region46: #{tpu_custom_call.1} parent=5 // pred_check_branch
        %383 = sbr.rel (%p381) target = $region48
      $region47: #{tpu_custom_call.1} parent=5 // pred_region
        %s384 = ssub.s32 %s16, 2
        // Predicated region
        $region49: #{tpu_custom_call.1} parent=47 // pred_check
          %p385 = pneg %p129
        $region50: #{tpu_custom_call.1} parent=47 // pred_check_branch
          %387 = sbr.rel (%p385) target = $region52
        $region51: #{tpu_custom_call.1} parent=47 // pred_region
          %s388 = sand.u32 %s114, 1
          %s389 = scalar_lea.sflag [#allocation4], %s388
          %s390 = sand.u32 %s114, 1
          %s391 = smul.addr %s390, 128
          %s392 = scalar_lea.vmem [#allocation7], %s391
          %394 = dma.done %s389, 2048
        $region52: #{tpu_custom_call.1} parent=47 // pred_fallthru
          _
      $region48: #{tpu_custom_call.1} parent=5 // pred_fallthru
        _
    $region6: #{tpu_custom_call.1} parent=1 // loop_footer
      %s20 = sadd.s32 1, %s16
    $region7: #{tpu_custom_call.1} parent=1 // loop_footer_branch
      %15 = sbr.rel target = $region3
    $region8: #{tpu_custom_call.1} parent=1 // loop_exit
      _
    %395 = vsyncpa [#allocation3], 1
    %s396 = scalar_lea.sflag [#allocation3], 1
    %397 = vsyncpa %s396, 1
    %398 = vsyncpa [#allocation6], 1
    %399 = vsyncpa [#allocation4], 1
    %s400 = scalar_lea.sflag [#allocation4], 1
    %401 = vsyncpa %s400, 1

</llo_original>
